<compile_context>
chip_gen: v7x
topology: tpu7x:2x2x1
jax: 0.10.0
libtpu: 0.0.40
codegen_flags: <defaults>
</compile_context>

<pallas_src>
import jax
import jax.numpy as jnp
from jax.experimental import pallas as pl
from jax.experimental.pallas import tpu as pltpu


_VMEM_LIMIT = 48 * 1024 * 1024      # < v7x 64 MiB/TC physical, > v5e 16 MiB default
_HIDDEN_BUDGET = 32 * 1024 * 1024   # target in-flight (double-buffered) hidden bytes


# ----------------------------- kernel helpers -------------------------------

def _masked_weighted_sum(mask_ref, h_ref):
    """sum_s mask[b, s] * h[b, s, :] accumulated in float32 -> (TB, H)."""
    h = h_ref[...]
    if h.dtype.itemsize <= 2:
        # 16-bit hidden states: contract on the MXU with f32 accumulation
        # (exact: mask entries are 0/1).  Frees the VPU/XLU slots.
        m = mask_ref[...].astype(jnp.float32).astype(h.dtype)[:, None, :]  # (TB,1,TS)
        num = jnp.einsum('bks,bsh->bkh', m, h,
                         preferred_element_type=jnp.float32)              # (TB,1,H)
        return num[:, 0, :]
    # 32-bit hidden states: exact f32 math on the VPU (kernel stays HBM-bound).
    m = mask_ref[...].astype(jnp.float32)                                  # (TB,TS)
    return jnp.sum(h.astype(jnp.float32) * m[:, :, None], axis=1)          # (TB,H)


def _mask_count(mask_ref):
    return jnp.sum(mask_ref[...].astype(jnp.float32), axis=-1, keepdims=True)


# ----------------------------- kernels ---------------------------------------

def _avg_kernel(mask_ref, h_ref, o_ref, num_acc, den_acc):
    s_idx = pl.program_id(1)

    @pl.when(s_idx == 0)
    def _init():
        num_acc[...] = jnp.zeros_like(num_acc)
        den_acc[...] = jnp.zeros_like(den_acc)

    num_acc[...] += _masked_weighted_sum(mask_ref, h_ref)
    den_acc[...] += _mask_count(mask_ref)

    @pl.when(s_idx == pl.num_programs(1) - 1)
    def _fin():
        # NOTE: all-zero mask rows give inf/NaN, matching the PyTorch module.
        o_ref[...] = (num_acc[...] / den_acc[...]).astype(o_ref.dtype)


def _avg2_kernel(mask_ref, h1_ref, h2_ref, o_ref, num_acc, den_acc):
    s_idx = pl.program_id(1)

    @pl.when(s_idx == 0)
    def _init():
        num_acc[...] = jnp.zeros_like(num_acc)
        den_acc[...] = jnp.zeros_like(den_acc)

    num_acc[...] += (_masked_weighted_sum(mask_ref, h1_ref)
                     + _masked_weighted_sum(mask_ref, h2_ref))
    den_acc[...] += _mask_count(mask_ref)

    @pl.when(s_idx == pl.num_programs(1) - 1)
    def _fin():
        # (h1 + h2) / 2: the 0.5 is folded into the denominator.
        o_ref[...] = (num_acc[...] / (2.0 * den_acc[...])).astype(o_ref.dtype)


def _cls_kernel(h_ref, o_ref):
    # h_ref: (TB, TS_cls, H) -- only the first few tokens are DMA'd in.
    o_ref[...] = h_ref[:, 0, :]


# ----------------------------- tiling ----------------------------------------

def _choose_tiles(B, S, H, n_hidden, itemsize):
    """Pick (batch_tile, seq_tile) honoring TPU (8,128) layout constraints and
    keeping double-buffered hidden blocks within ~_HIDDEN_BUDGET bytes."""
    tb = 8 if B % 8 == 0 else B
    max_ts = _HIDDEN_BUDGET // (2 * n_hidden * tb * H * itemsize)
    if S <= max_ts:
        return tb, S
    if S % 128 == 0 and max_ts >= 128:
        ts = (max_ts // 128) * 128
        while ts >= 128:
            if S % ts == 0:
                return tb, ts
            ts -= 128
    # TODO(synk): ragged sequence lengths with very large H fall back to a
    # full-sequence block and may exceed the VMEM budget on v7x.
    return tb, S


# ----------------------------- wrappers ---------------------------------------

def _masked_avg(attention_mask, hidden):
    B, S, H = hidden.shape
    tb, ts = _choose_tiles(B, S, H, 1, hidden.dtype.itemsize)
    return pl.pallas_call(
        _avg_kernel,
        out_shape=jax.ShapeDtypeStruct((B, H), hidden.dtype),
        grid_spec=pltpu.PrefetchScalarGridSpec(
            num_scalar_prefetch=0,
            grid=(B // tb, S // ts),
            in_specs=[
                pl.BlockSpec((tb, ts), lambda b, s: (b, s)),
                pl.BlockSpec((tb, ts, H), lambda b, s: (b, s, 0)),
            ],
            out_specs=pl.BlockSpec((tb, H), lambda b, s: (b, 0)),
            scratch_shapes=[
                pltpu.VMEM((tb, H), jnp.float32),   # numerator accumulator
                pltpu.VMEM((tb, 1), jnp.float32),   # mask-count accumulator
            ],
        ),
        compiler_params=pltpu.CompilerParams(
            dimension_semantics=("parallel", "arbitrary"),
            vmem_limit_bytes=_VMEM_LIMIT),
    )(attention_mask, hidden)


def _masked_avg_two(attention_mask, hidden_a, hidden_b):
    B, S, H = hidden_a.shape
    tb, ts = _choose_tiles(B, S, H, 2, hidden_a.dtype.itemsize)
    return pl.pallas_call(
        _avg2_kernel,
        out_shape=jax.ShapeDtypeStruct((B, H), hidden_a.dtype),
        grid_spec=pltpu.PrefetchScalarGridSpec(
            num_scalar_prefetch=0,
            grid=(B // tb, S // ts),
            in_specs=[
                pl.BlockSpec((tb, ts), lambda b, s: (b, s)),
                pl.BlockSpec((tb, ts, H), lambda b, s: (b, s, 0)),
                pl.BlockSpec((tb, ts, H), lambda b, s: (b, s, 0)),
            ],
            out_specs=pl.BlockSpec((tb, H), lambda b, s: (b, 0)),
            scratch_shapes=[
                pltpu.VMEM((tb, H), jnp.float32),
                pltpu.VMEM((tb, 1), jnp.float32),
            ],
        ),
        compiler_params=pltpu.CompilerParams(
            dimension_semantics=("parallel", "arbitrary"),
            vmem_limit_bytes=_VMEM_LIMIT),
    )(attention_mask, hidden_a, hidden_b)


def _cls_pool(hidden):
    B, S, H = hidden.shape
    tb = 8 if B % 8 == 0 else B
    ts = S if S < 8 else 8          # only fetch the first 8 tokens per row
    return pl.pallas_call(
        _cls_kernel,
        out_shape=jax.ShapeDtypeStruct((B, H), hidden.dtype),
        grid_spec=pltpu.PrefetchScalarGridSpec(
            num_scalar_prefetch=0,
            grid=(B // tb,),
            in_specs=[pl.BlockSpec((tb, ts, H), lambda b: (b, 0, 0))],
            out_specs=pl.BlockSpec((tb, H), lambda b: (b, 0)),
        ),
        compiler_params=pltpu.CompilerParams(
            dimension_semantics=("parallel",)),
    )(hidden)


def pooler_forward(pooler_type, attention_mask, last_hidden_state,
                   pooler_output=None, hidden_states=None):
    """Mirror of Pooler.forward.

    attention_mask:    [B, S]
    last_hidden_state: [B, S, H]
    hidden_states:     tuple of [B, S, H] (all layers); needed for
                       'avg_first_last' / 'avg_top2'
    """
    assert pooler_type in ['cls', 'cls_before_pooler', 'avg',
                           'avg_top2', 'avg_first_last']
    if pooler_type in ('cls', 'cls_before_pooler'):
        return _cls_pool(last_hidden_state)
    elif pooler_type == 'avg':
        return _masked_avg(attention_mask, last_hidden_state)
    elif pooler_type == 'avg_first_last':
        return _masked_avg_two(attention_mask, hidden_states[0],
                               hidden_states[-1])
    elif pooler_type == 'avg_top2':
        return _masked_avg_two(attention_mask, hidden_states[-1],
                               hidden_states[-2])
    else:
        raise NotImplementedError


# ----------------------------- reference -------------------------------------

def _ref_forward(pooler_type, attention_mask, last_hidden, hidden_states):
    m = attention_mask.astype(jnp.float32)
    if pooler_type in ('cls', 'cls_before_pooler'):
        return last_hidden[:, 0]
    if pooler_type == 'avg':
        return (last_hidden * m[..., None]).sum(1) / m.sum(-1)[..., None]
    if pooler_type == 'avg_first_last':
        h = (hidden_states[0] + hidden_states[-1]) / 2.0
        return (h * m[..., None]).sum(1) / m.sum(-1)[..., None]
    if pooler_type == 'avg_top2':
        h = (hidden_states[-1] + hidden_states[-2]) / 2.0
        return (h * m[..., None]).sum(1) / m.sum(-1)[..., None]
    raise NotImplementedError


# ----------------------------- main -------------------------------------------

if __name__ == "__main__":
    key = jax.random.PRNGKey(0)
    B, S, H = 2, 8, 32
    n_layers = 3  # pretend transformer with 3 hidden-state layers

    k_h, k_m = jax.random.split(key)
    hidden_states = tuple(
        jax.random.normal(jax.random.fold_in(k_h, i), (B, S, H),
                          dtype=jnp.float32)
        for i in range(n_layers)
    )
    last_hidden = hidden_states[-1]
    lengths = jnp.array([6, 4], dtype=jnp.int32)
    attention_mask = (jnp.arange(S)[None, :] < lengths[:, None]).astype(jnp.int32)

    ok = True
    # f32 inputs: exact path, tight tolerance.
    for ptype in ['cls', 'cls_before_pooler', 'avg',
                  'avg_first_last', 'avg_top2']:
        out = pooler_forward(ptype, attention_mask, last_hidden,
                             pooler_output=None, hidden_states=hidden_states)
        out = jax.block_until_ready(out)
        ref = _ref_forward(ptype, attention_mask, last_hidden, hidden_states)
        if out.shape != (B, H) or not jnp.allclose(out, ref, atol=1e-5, rtol=1e-5):
            ok = False

    # bf16 smoke test: native-dtype HBM traffic, f32 accumulation via MXU path.
    hs_bf16 = tuple(h.astype(jnp.bfloat16) for h in hidden_states)
    out_bf16 = jax.block_until_ready(
        pooler_forward('avg', attention_mask, hs_bf16[-1],
                       hidden_states=hs_bf16))
    ref_bf16 = _ref_forward('avg', attention_mask,
                            hs_bf16[-1].astype(jnp.float32),
                            tuple(h.astype(jnp.float32) for h in hs_bf16))
    if out_bf16.shape != (B, H) or not jnp.allclose(
            out_bf16.astype(jnp.float32), ref_bf16, atol=5e-2, rtol=5e-2):
        ok = False

    print("KERNEL_OK" if ok else "KERNEL_MISMATCH")
</pallas_src>

<mosaic_0001>
module attributes {stable_mosaic.version = 11 : i64} {
  func.func @_cls_kernel(%arg0: i32, %arg1: memref<2x8x32xf32, #tpu.memory_space<vmem>>, %arg2: memref<2x32xf32, #tpu.memory_space<vmem>>) attributes {dimension_semantics = [#tpu.dimension_semantics<parallel>], iteration_bounds = array<i64: 1>, scalar_prefetch = 0 : i64, scratch_operands = 0 : i64, tpu.core_type = #tpu.core_type<tc>, window_params = [{transform_indices = @transform_0, window_bounds = array<i64: 2, 8, 32>}, {transform_indices = @transform_1, window_bounds = array<i64: 2, 32>}]} {
    %c0 = arith.constant 0 : index
    %c0_0 = arith.constant 0 : index
    %c0_1 = arith.constant 0 : index
    %0 = vector.load %arg1[%c0, %c0_0, %c0_1] : memref<2x8x32xf32, #tpu.memory_space<vmem>>, vector<2x1x32xf32>
    %1 = vector.shape_cast %0 : vector<2x1x32xf32> to vector<2x32xf32>
    %c0_2 = arith.constant 0 : index
    %c0_3 = arith.constant 0 : index
    %2 = vector.load %arg2[%c0_2, %c0_3] : memref<2x32xf32, #tpu.memory_space<vmem>>, vector<2x32xf32>
    tpu.vector_store %arg2[%c0_2, %c0_3], %1 {strides = array<i32>} : memref<2x32xf32, #tpu.memory_space<vmem>>, vector<2x32xf32>,
    return
  }
  func.func @transform_0(%arg0: i32) -> (i32, i32, i32) {
    %c0_i32 = arith.constant 0 : i32
    %c0_i32_0 = arith.constant 0 : i32
    %c0_i32_1 = arith.constant 0 : i32
    return %arg0, %c0_i32, %c0_i32_0 : i32, i32, i32
  }
  func.func @transform_1(%arg0: i32) -> (i32, i32) {
    %c0_i32 = arith.constant 0 : i32
    %c0_i32_0 = arith.constant 0 : i32
    return %arg0, %c0_i32 : i32, i32
  }
}

</mosaic_0001>

<llo_original>
// kernel: tpu_custom_call.1
$region0: #{tpu_custom_call.1}
  #allocation0 [shape = 'u32[]', space=smem, size = 0x4, offset = 0x4, fixed_abs, tag = 'smem constant byte address 0x4 - core index']
  #allocation1 [shape = 'u32[144,128]{1,0:T(1,128)}', space=vmem, size = 0x12000, scoped, tag = 'internal scratch']
  %s0 = inlined_call_operand.hbm [shape: f32[2,8,32], index: 0, kind: input, shape index: {}]
  %s1 = inlined_call_operand.hbm [shape: f32[2,32], index: 1, kind: output, shape index: {}]
  %s2 = sld [smem:[#allocation0]]
  $region18: #{tpu_custom_call.1} parent=0
    _
  %s4 = ssub.s32 1, %s2
  %s5 = scalar_select 0, %s4, %s2
  $region1: #{tpu_custom_call.1} parent=0
    #allocation2 [shape = 'u8[8192]{0}', space=vmem, size = 0x2000, scoped, tag = 'input window, operand 0, single buffered']
    #allocation3 [shape = 's32[1]{0}', space=sflag, size = 0x4, scoped, tag = 'scoped memory for tpu_custom_call.1']
    #allocation4 [shape = 's32[1]{0}', space=sflag, size = 0x4, scoped, tag = 'scoped memory for tpu_custom_call.1']
    #allocation5 [shape = 'u8[1024]{0}', space=vmem, size = 0x400, scoped, tag = 'output window, operand 0, single buffered']
    %6 = vsyncpa [#allocation3], 0
    %7 = vsyncpa [#allocation4], 0
    // Predicated region
    $region2: #{tpu_custom_call.1} parent=1 // pred_check
      _
    $region3: #{tpu_custom_call.1} parent=1 // pred_check_branch
      %9 = sbr.rel (0) target = $region5
    $region4: #{tpu_custom_call.1} parent=1 // pred_region
      %s11 = ssub.s32 256, 256
      %12 = vsyncadd [#allocation3], %s11
      %s13 = sshll.u32 [#allocation2], 4
      %s14 = int_to_ptr.vmem [resolvable:$true] %s13
      %19 = dma.hbm_to_vmem [thread:$0]  %s0, 256, %s14, [#allocation3], 128, 128, 8
    $region5: #{tpu_custom_call.1} parent=1 // pred_fallthru
      _
    // Predicated region
    $region6: #{tpu_custom_call.1} parent=1 // pred_check
      _
    $region7: #{tpu_custom_call.1} parent=1 // pred_check_branch
      %21 = sbr.rel (0) target = $region9
    $region8: #{tpu_custom_call.1} parent=1 // pred_region
      %22 = dma.done [#allocation3], 256
    $region9: #{tpu_custom_call.1} parent=1 // pred_fallthru
      _
    %v23 = vld [vmem:[#allocation2] sm:$0x1]
    %v24 = vld [vmem:[#allocation2 + $0x8] sm:$0x1]
    %v27 = vrot.slane %v24, 7
    %vm28 = vcmask 1041409
    %v29 = vsel %vm28, %v27, %v23
    %vm31 = vcmask 254976
    %32 = vst.msk [vmem:[#allocation5] sm:$0x3] %vm31, %v29
    // Predicated region
    $region10: #{tpu_custom_call.1} parent=1 // pred_check
      _
    $region11: #{tpu_custom_call.1} parent=1 // pred_check_branch
      %34 = sbr.rel (0) target = $region13
    $region12: #{tpu_custom_call.1} parent=1 // pred_region
      %s36 = ssub.s32 32, 32
      %37 = vsyncadd [#allocation4], %s36
      %s39 = sshll.u32 [#allocation5], 4
      %s40 = int_to_ptr.vmem [resolvable:$true] %s39
      %42 = dma.vmem_to_hbm [thread:$0]  %s40, 32, %s1, [#allocation4]
    $region13: #{tpu_custom_call.1} parent=1 // pred_fallthru
      _
    // Predicated region
    $region14: #{tpu_custom_call.1} parent=1 // pred_check
      _
    $region15: #{tpu_custom_call.1} parent=1 // pred_check_branch
      %44 = sbr.rel (0) target = $region17
    $region16: #{tpu_custom_call.1} parent=1 // pred_region
      %45 = dma.done [#allocation4], 32
    $region17: #{tpu_custom_call.1} parent=1 // pred_fallthru
      _
    %46 = vsyncpa [#allocation3], 1
    %47 = vsyncpa [#allocation4], 1

</llo_original>
